<compile_context>
chip_gen: v5e
topology: v5e:2x2
jax: 0.10.0
libtpu: 0.0.40
codegen_flags: <defaults>
</compile_context>

<pallas_src>
import math
import functools

import jax
import jax.numpy as jnp
from jax import lax
from jax.experimental import pallas as pl
from jax.experimental.pallas import tpu as pltpu


# ----------------------------- in-kernel helpers -----------------------------

def _attention_core(q, k, v, h, d_k):
    """Scaled dot-product attention over all heads.

    q: (Sq, D) f32, k/v: (Sk, D) f32 (already projected, bias added).
    Heads are unrolled statically (h is small) so everything stays plain 2-D
    MXU matmuls + lane slices — no in-kernel reshapes/transposes to relayout.
    Returns the merged context (Sq, D) in f32.
    """
    scale = 1.0 / math.sqrt(d_k)
    outs = []
    for i in range(h):
        lo = i * d_k
        qi = q[:, lo:lo + d_k].astype(jnp.bfloat16)          # (Sq, d_k)
        ki = k[:, lo:lo + d_k].astype(jnp.bfloat16)          # (Sk, d_k)
        vi = v[:, lo:lo + d_k].astype(jnp.bfloat16)          # (Sk, d_k)
        # scores = q @ k^T / sqrt(d_k)   (f32 accumulation on the MXU)
        s = lax.dot_general(qi, ki, (((1,), (1,)), ((), ())),
                            preferred_element_type=jnp.float32) * scale   # (Sq, Sk)
        s = s - jnp.max(s, axis=-1, keepdims=True)
        e = jnp.exp(s)
        p = e * pl.reciprocal(jnp.sum(e, axis=-1, keepdims=True), approx=True)
        outs.append(jnp.dot(p.astype(jnp.bfloat16), vi,
                            preferred_element_type=jnp.float32))          # (Sq, d_k)
    return jnp.concatenate(outs, axis=-1)                    # (Sq, D)


def _mha_self_kernel(x_ref, wqkv_ref, bqkv_ref, wo_ref, bo_ref, o_ref,
                     *, h, d_k, d_model):
    """Self-attention fast path: one fused (S,D)@(D,3D) QKV matmul."""
    D = d_model
    x = x_ref[0].astype(jnp.bfloat16)                                        # (S, D)
    qkv = jnp.dot(x, wqkv_ref[...],
                  preferred_element_type=jnp.float32) + bqkv_ref[...]        # (S, 3D)
    q = qkv[:, 0:D]
    k = qkv[:, D:2 * D]
    v = qkv[:, 2 * D:3 * D]
    ctx = _attention_core(q, k, v, h, d_k)                                   # (S, D)
    out = jnp.dot(ctx.astype(jnp.bfloat16), wo_ref[...],
                  preferred_element_type=jnp.float32) + bo_ref[...]
    o_ref[0] = out.astype(o_ref.dtype)


def _mha_kernel(q_ref, k_ref, v_ref, wqkv_ref, bqkv_ref, wo_ref, bo_ref, o_ref,
                *, h, d_k, d_model):
    """General path: distinct query / key / value inputs."""
    D = d_model
    q_in = q_ref[0].astype(jnp.bfloat16)                                     # (Sq, D)
    k_in = k_ref[0].astype(jnp.bfloat16)                                     # (Sk, D)
    v_in = v_ref[0].astype(jnp.bfloat16)                                     # (Sk, D)
    q = jnp.dot(q_in, wqkv_ref[:, 0:D],
                preferred_element_type=jnp.float32) + bqkv_ref[:, 0:D]
    k = jnp.dot(k_in, wqkv_ref[:, D:2 * D],
                preferred_element_type=jnp.float32) + bqkv_ref[:, D:2 * D]
    v = jnp.dot(v_in, wqkv_ref[:, 2 * D:3 * D],
                preferred_element_type=jnp.float32) + bqkv_ref[:, 2 * D:3 * D]
    ctx = _attention_core(q, k, v, h, d_k)                                   # (Sq, D)
    out = jnp.dot(ctx.astype(jnp.bfloat16), wo_ref[...],
                  preferred_element_type=jnp.float32) + bo_ref[...]
    o_ref[0] = out.astype(o_ref.dtype)


# ------------------------------- wrapper (forward) ----------------------------

def multi_head_attention(params, query, key, value):
    """Pallas equivalent of MultiHeadedAttention.forward (mask=None, eval mode).

    query: (B, Sq, D), key/value: (B, Sk, D).  Returns (B, Sq, D) float32.
    One fused pallas_call; grid=(B,) marked "parallel".
    TODO(synk): the optional `mask` argument and the stored `self.attn` side
    attribute are not materialized (the reference forward calls attention()
    with mask=None and never applies dropout to p_attn).
    """
    B, Sq, D = query.shape
    Sk = key.shape[1]
    h = params["h"]
    d_k = D // h
    wqkv = params["wqkv_t"]     # (D, 3D)  bf16, pre-transposed + pre-concatenated
    bqkv = params["bqkv"]       # (1, 3D)  f32
    wo = params["wo_t"]         # (D, D)   bf16, pre-transposed
    bo = params["bo"]           # (1, D)   f32

    cparams = pltpu.CompilerParams(
        dimension_semantics=("parallel",),
        vmem_limit_bytes=32 * 1024 * 1024,
    )
    out_shape = jax.ShapeDtypeStruct((B, Sq, D), jnp.float32)
    weight_specs = [
        pl.BlockSpec((D, 3 * D), lambda b: (0, 0)),   # wqkv_t (VMEM-resident)
        pl.BlockSpec((1, 3 * D), lambda b: (0, 0)),   # bqkv
        pl.BlockSpec((D, D), lambda b: (0, 0)),       # wo_t
        pl.BlockSpec((1, D), lambda b: (0, 0)),       # bo
    ]
    out_spec = pl.BlockSpec((1, Sq, D), lambda b: (b, 0, 0))

    if (query is key) and (key is value):
        # Self-attention: single fused QKV matmul against the (D, 3D) weight.
        kern = functools.partial(_mha_self_kernel, h=h, d_k=d_k, d_model=D)
        return pl.pallas_call(
            kern,
            out_shape=out_shape,
            grid=(B,),
            in_specs=[pl.BlockSpec((1, Sq, D), lambda b: (b, 0, 0))] + weight_specs,
            out_specs=out_spec,
            compiler_params=cparams,
        )(query, wqkv, bqkv, wo, bo)

    kern = functools.partial(_mha_kernel, h=h, d_k=d_k, d_model=D)
    return pl.pallas_call(
        kern,
        out_shape=out_shape,
        grid=(B,),
        in_specs=[pl.BlockSpec((1, Sq, D), lambda b: (b, 0, 0)),
                  pl.BlockSpec((1, Sk, D), lambda b: (b, 0, 0)),
                  pl.BlockSpec((1, Sk, D), lambda b: (b, 0, 0))] + weight_specs,
        out_specs=out_spec,
        compiler_params=cparams,
    )(query, key, value, wqkv, bqkv, wo, bo)


# ------------------------------- parameters ----------------------------------

def init_mha_params(key, h, d_model):
    """nn.Linear-default init, then pre-transpose / pre-concatenate / cast once."""
    assert d_model % h == 0
    ks = jax.random.split(key, 8)
    bound = 1.0 / math.sqrt(d_model)

    def lin(kw, kb):
        w = jax.random.uniform(kw, (d_model, d_model), jnp.float32, -bound, bound)
        b = jax.random.uniform(kb, (d_model,), jnp.float32, -bound, bound)
        return w, b

    wq, bq = lin(ks[0], ks[1])
    wk, bk = lin(ks[2], ks[3])
    wv, bv = lin(ks[4], ks[5])
    wo, bo = lin(ks[6], ks[7])
    # Weights stored transposed to (in, out), QKV concatenated, bf16 (MXU-native).
    wqkv_t = jnp.concatenate([wq.T, wk.T, wv.T], axis=1).astype(jnp.bfloat16)  # (D, 3D)
    bqkv = jnp.concatenate([bq, bk, bv])[None, :]                               # (1, 3D) f32
    return dict(
        h=h,
        wqkv_t=wqkv_t,
        bqkv=bqkv,
        wo_t=wo.T.astype(jnp.bfloat16),
        bo=bo[None, :],
    )


# ------------------------------- f32 reference --------------------------------

def mha_reference(params, query, key, value):
    """Pure-JAX f32 reference mirroring the PyTorch module (bf16 weights upcast)."""
    h = params["h"]
    B, Sq, D = query.shape
    Sk = key.shape[1]
    d_k = D // h
    wqkv = params["wqkv_t"].astype(jnp.float32)
    bqkv = params["bqkv"][0]
    wo = params["wo_t"].astype(jnp.float32)
    bo = params["bo"][0]
    q = query @ wqkv[:, :D] + bqkv[:D]
    k = key @ wqkv[:, D:2 * D] + bqkv[D:2 * D]
    v = value @ wqkv[:, 2 * D:] + bqkv[2 * D:]
    qh = q.reshape(B, Sq, h, d_k).transpose(0, 2, 1, 3)
    kh = k.reshape(B, Sk, h, d_k).transpose(0, 2, 1, 3)
    vh = v.reshape(B, Sk, h, d_k).transpose(0, 2, 1, 3)
    s = jnp.einsum("bhqd,bhkd->bhqk", qh, kh) / math.sqrt(d_k)
    p = jax.nn.softmax(s, axis=-1)
    ctx = jnp.einsum("bhqk,bhkd->bhqd", p, vh).transpose(0, 2, 1, 3).reshape(B, Sq, D)
    return ctx @ wo + bo


# ----------------------------------- demo -------------------------------------

if __name__ == "__main__":
    d_model, h = 32, 4
    B, Sq, Sk = 2, 8, 16

    key = jax.random.PRNGKey(0)
    kp, kx, kq, kk, kv = jax.random.split(key, 5)
    params = init_mha_params(kp, h, d_model)

    # Self-attention path (query is key is value) -> fused single-QKV-matmul kernel.
    x = jax.random.normal(kx, (B, Sq, d_model), jnp.float32)
    out_self = multi_head_attention(params, x, x, x)

    # General cross-attention path with distinct query / key / value.
    q_in = jax.random.normal(kq, (B, Sq, d_model), jnp.float32)
    k_in = jax.random.normal(kk, (B, Sk, d_model), jnp.float32)
    v_in = jax.random.normal(kv, (B, Sk, d_model), jnp.float32)
    out_cross = multi_head_attention(params, q_in, k_in, v_in)

    jax.block_until_ready((out_self, out_cross))

    assert out_self.shape == (B, Sq, d_model), out_self.shape
    assert out_cross.shape == (B, Sq, d_model), out_cross.shape
    assert bool(jnp.all(jnp.isfinite(out_self)))
    assert bool(jnp.all(jnp.isfinite(out_cross)))

    # General kernel on identical q=k=v must match the fused self-attention path.
    x_alias = x * 1.0  # new array object -> forces the general (3-matmul) path
    out_gen_same = multi_head_attention(params, x, x_alias, x_alias)
    ref_self = mha_reference(params, x, x, x)
    ref_cross = mha_reference(params, q_in, k_in, v_in)
    jax.block_until_ready((out_gen_same, ref_self, ref_cross))

    assert float(jnp.max(jnp.abs(out_gen_same - out_self))) < 1e-3
    # bf16 matmul operands + approx reciprocal vs f32 reference: loose tolerance.
    assert float(jnp.max(jnp.abs(out_self - ref_self))) < 1e-1
    assert float(jnp.max(jnp.abs(out_cross - ref_cross))) < 1e-1

    print("KERNEL_OK")
</pallas_src>

<mosaic_0001>
module attributes {stable_mosaic.version = 11 : i64} {
  func.func @_mha_self_kernel(%arg0: i32, %arg1: memref<1x8x32xf32, #tpu.memory_space<vmem>>, %arg2: memref<32x96xbf16, #tpu.memory_space<vmem>>, %arg3: memref<1x96xf32, #tpu.memory_space<vmem>>, %arg4: memref<32x32xbf16, #tpu.memory_space<vmem>>, %arg5: memref<1x32xf32, #tpu.memory_space<vmem>>, %arg6: memref<1x8x32xf32, #tpu.memory_space<vmem>>) attributes {dimension_semantics = [#tpu.dimension_semantics<parallel>], iteration_bounds = array<i64: 2>, scalar_prefetch = 0 : i64, scratch_operands = 0 : i64, tpu.core_type = #tpu.core_type<tc>, window_params = [{transform_indices = @transform_0, window_bounds = array<i64: 1, 8, 32>}, {pipeline_mode = #tpu.pipeline_mode<synchronous>, transform_indices = @transform_1, window_bounds = array<i64: 32, 96>}, {pipeline_mode = #tpu.pipeline_mode<synchronous>, transform_indices = @transform_2, window_bounds = array<i64: 1, 96>}, {pipeline_mode = #tpu.pipeline_mode<synchronous>, transform_indices = @transform_3, window_bounds = array<i64: 32, 32>}, {pipeline_mode = #tpu.pipeline_mode<synchronous>, transform_indices = @transform_4, window_bounds = array<i64: 1, 32>}, {transform_indices = @transform_5, window_bounds = array<i64: 1, 8, 32>}]} {
    %c0 = arith.constant 0 : index
    %c0_0 = arith.constant 0 : index
    %c0_1 = arith.constant 0 : index
    %0 = vector.load %arg1[%c0, %c0_0, %c0_1] : memref<1x8x32xf32, #tpu.memory_space<vmem>>, vector<1x8x32xf32>
    %1 = vector.shape_cast %0 : vector<1x8x32xf32> to vector<8x32xf32>
    %2 = arith.truncf %1 : vector<8x32xf32> to vector<8x32xbf16>
    %c0_2 = arith.constant 0 : index
    %c0_3 = arith.constant 0 : index
    %3 = vector.load %arg2[%c0_2, %c0_3] : memref<32x96xbf16, #tpu.memory_space<vmem>>, vector<32x96xbf16>
    %cst = arith.constant dense<0.000000e+00> : vector<8x96xf32>
    %4 = tpu.matmul %2, %3, %cst {dimension_numbers = #tpu.dot_dimension_numbers<[1], [0], [0], [1], [0, 0, 1, 1], [], []>} : vector<8x32xbf16>, vector<32x96xbf16>, vector<8x96xf32> -> vector<8x96xf32>
    %c0_4 = arith.constant 0 : index
    %c0_5 = arith.constant 0 : index
    %5 = vector.load %arg3[%c0_4, %c0_5] : memref<1x96xf32, #tpu.memory_space<vmem>>, vector<1x96xf32>
    %6 = vector.broadcast %5 : vector<1x96xf32> to vector<8x96xf32>
    %7 = arith.addf %4, %6 : vector<8x96xf32>
    %8 = vector.extract_strided_slice %7 {offsets = [0, 0], sizes = [8, 32], strides = [1, 1]} : vector<8x96xf32> to vector<8x32xf32>
    %9 = vector.extract_strided_slice %7 {offsets = [0, 32], sizes = [8, 32], strides = [1, 1]} : vector<8x96xf32> to vector<8x32xf32>
    %10 = vector.extract_strided_slice %7 {offsets = [0, 64], sizes = [8, 32], strides = [1, 1]} : vector<8x96xf32> to vector<8x32xf32>
    %11 = vector.extract_strided_slice %8 {offsets = [0, 0], sizes = [8, 8], strides = [1, 1]} : vector<8x32xf32> to vector<8x8xf32>
    %12 = arith.truncf %11 : vector<8x8xf32> to vector<8x8xbf16>
    %13 = vector.extract_strided_slice %9 {offsets = [0, 0], sizes = [8, 8], strides = [1, 1]} : vector<8x32xf32> to vector<8x8xf32>
    %14 = arith.truncf %13 : vector<8x8xf32> to vector<8x8xbf16>
    %15 = vector.extract_strided_slice %10 {offsets = [0, 0], sizes = [8, 8], strides = [1, 1]} : vector<8x32xf32> to vector<8x8xf32>
    %16 = arith.truncf %15 : vector<8x8xf32> to vector<8x8xbf16>
    %cst_6 = arith.constant dense<0.000000e+00> : vector<8x8xf32>
    %17 = tpu.matmul %12, %14, %cst_6 {dimension_numbers = #tpu.dot_dimension_numbers<[1], [1], [0], [0], [0, 0, 1, 0], [], []>} : vector<8x8xbf16>, vector<8x8xbf16>, vector<8x8xf32> -> vector<8x8xf32>
    %cst_7 = arith.constant 0.353553385 : f32
    %18 = vector.broadcast %cst_7 : f32 to vector<8x8xf32>
    %19 = arith.mulf %17, %18 : vector<8x8xf32>
    %cst_8 = arith.constant dense<0xFF800000> : vector<8xf32>
    %20 = vector.multi_reduction <maximumf>, %19, %cst_8 [1] : vector<8x8xf32> to vector<8xf32>
    %21 = vector.shape_cast %20 : vector<8xf32> to vector<8x1xf32>
    %22 = vector.broadcast %21 : vector<8x1xf32> to vector<8x8xf32>
    %23 = arith.subf %19, %22 : vector<8x8xf32>
    %24 = math.exp %23 : vector<8x8xf32>
    %cst_9 = arith.constant dense<0.000000e+00> : vector<8xf32>
    %25 = vector.multi_reduction <add>, %24, %cst_9 [1] : vector<8x8xf32> to vector<8xf32>
    %26 = vector.shape_cast %25 : vector<8xf32> to vector<8x1xf32>
    %27 = tpu.reciprocal %26 {approx = true} : vector<8x1xf32> -> vector<8x1xf32>
    %28 = vector.broadcast %27 : vector<8x1xf32> to vector<8x8xf32>
    %29 = arith.mulf %24, %28 : vector<8x8xf32>
    %30 = arith.truncf %29 : vector<8x8xf32> to vector<8x8xbf16>
    %cst_10 = arith.constant dense<0.000000e+00> : vector<8x8xf32>
    %31 = tpu.matmul %30, %16, %cst_10 {dimension_numbers = #tpu.dot_dimension_numbers<[1], [0], [0], [1], [0, 0, 1, 1], [], []>} : vector<8x8xbf16>, vector<8x8xbf16>, vector<8x8xf32> -> vector<8x8xf32>
    %32 = vector.extract_strided_slice %8 {offsets = [0, 8], sizes = [8, 8], strides = [1, 1]} : vector<8x32xf32> to vector<8x8xf32>
    %33 = arith.truncf %32 : vector<8x8xf32> to vector<8x8xbf16>
    %34 = vector.extract_strided_slice %9 {offsets = [0, 8], sizes = [8, 8], strides = [1, 1]} : vector<8x32xf32> to vector<8x8xf32>
    %35 = arith.truncf %34 : vector<8x8xf32> to vector<8x8xbf16>
    %36 = vector.extract_strided_slice %10 {offsets = [0, 8], sizes = [8, 8], strides = [1, 1]} : vector<8x32xf32> to vector<8x8xf32>
    %37 = arith.truncf %36 : vector<8x8xf32> to vector<8x8xbf16>
    %cst_11 = arith.constant dense<0.000000e+00> : vector<8x8xf32>
    %38 = tpu.matmul %33, %35, %cst_11 {dimension_numbers = #tpu.dot_dimension_numbers<[1], [1], [0], [0], [0, 0, 1, 0], [], []>} : vector<8x8xbf16>, vector<8x8xbf16>, vector<8x8xf32> -> vector<8x8xf32>
    %cst_12 = arith.constant 0.353553385 : f32
    %39 = vector.broadcast %cst_12 : f32 to vector<8x8xf32>
    %40 = arith.mulf %38, %39 : vector<8x8xf32>
    %cst_13 = arith.constant dense<0xFF800000> : vector<8xf32>
    %41 = vector.multi_reduction <maximumf>, %40, %cst_13 [1] : vector<8x8xf32> to vector<8xf32>
    %42 = vector.shape_cast %41 : vector<8xf32> to vector<8x1xf32>
    %43 = vector.broadcast %42 : vector<8x1xf32> to vector<8x8xf32>
    %44 = arith.subf %40, %43 : vector<8x8xf32>
    %45 = math.exp %44 : vector<8x8xf32>
    %cst_14 = arith.constant dense<0.000000e+00> : vector<8xf32>
    %46 = vector.multi_reduction <add>, %45, %cst_14 [1] : vector<8x8xf32> to vector<8xf32>
    %47 = vector.shape_cast %46 : vector<8xf32> to vector<8x1xf32>
    %48 = tpu.reciprocal %47 {approx = true} : vector<8x1xf32> -> vector<8x1xf32>
    %49 = vector.broadcast %48 : vector<8x1xf32> to vector<8x8xf32>
    %50 = arith.mulf %45, %49 : vector<8x8xf32>
    %51 = arith.truncf %50 : vector<8x8xf32> to vector<8x8xbf16>
    %cst_15 = arith.constant dense<0.000000e+00> : vector<8x8xf32>
    %52 = tpu.matmul %51, %37, %cst_15 {dimension_numbers = #tpu.dot_dimension_numbers<[1], [0], [0], [1], [0, 0, 1, 1], [], []>} : vector<8x8xbf16>, vector<8x8xbf16>, vector<8x8xf32> -> vector<8x8xf32>
    %53 = vector.extract_strided_slice %8 {offsets = [0, 16], sizes = [8, 8], strides = [1, 1]} : vector<8x32xf32> to vector<8x8xf32>
    %54 = arith.truncf %53 : vector<8x8xf32> to vector<8x8xbf16>
    %55 = vector.extract_strided_slice %9 {offsets = [0, 16], sizes = [8, 8], strides = [1, 1]} : vector<8x32xf32> to vector<8x8xf32>
    %56 = arith.truncf %55 : vector<8x8xf32> to vector<8x8xbf16>
    %57 = vector.extract_strided_slice %10 {offsets = [0, 16], sizes = [8, 8], strides = [1, 1]} : vector<8x32xf32> to vector<8x8xf32>
    %58 = arith.truncf %57 : vector<8x8xf32> to vector<8x8xbf16>
    %cst_16 = arith.constant dense<0.000000e+00> : vector<8x8xf32>
    %59 = tpu.matmul %54, %56, %cst_16 {dimension_numbers = #tpu.dot_dimension_numbers<[1], [1], [0], [0], [0, 0, 1, 0], [], []>} : vector<8x8xbf16>, vector<8x8xbf16>, vector<8x8xf32> -> vector<8x8xf32>
    %cst_17 = arith.constant 0.353553385 : f32
    %60 = vector.broadcast %cst_17 : f32 to vector<8x8xf32>
    %61 = arith.mulf %59, %60 : vector<8x8xf32>
    %cst_18 = arith.constant dense<0xFF800000> : vector<8xf32>
    %62 = vector.multi_reduction <maximumf>, %61, %cst_18 [1] : vector<8x8xf32> to vector<8xf32>
    %63 = vector.shape_cast %62 : vector<8xf32> to vector<8x1xf32>
    %64 = vector.broadcast %63 : vector<8x1xf32> to vector<8x8xf32>
    %65 = arith.subf %61, %64 : vector<8x8xf32>
    %66 = math.exp %65 : vector<8x8xf32>
    %cst_19 = arith.constant dense<0.000000e+00> : vector<8xf32>
    %67 = vector.multi_reduction <add>, %66, %cst_19 [1] : vector<8x8xf32> to vector<8xf32>
    %68 = vector.shape_cast %67 : vector<8xf32> to vector<8x1xf32>
    %69 = tpu.reciprocal %68 {approx = true} : vector<8x1xf32> -> vector<8x1xf32>
    %70 = vector.broadcast %69 : vector<8x1xf32> to vector<8x8xf32>
    %71 = arith.mulf %66, %70 : vector<8x8xf32>
    %72 = arith.truncf %71 : vector<8x8xf32> to vector<8x8xbf16>
    %cst_20 = arith.constant dense<0.000000e+00> : vector<8x8xf32>
    %73 = tpu.matmul %72, %58, %cst_20 {dimension_numbers = #tpu.dot_dimension_numbers<[1], [0], [0], [1], [0, 0, 1, 1], [], []>} : vector<8x8xbf16>, vector<8x8xbf16>, vector<8x8xf32> -> vector<8x8xf32>
    %74 = vector.extract_strided_slice %8 {offsets = [0, 24], sizes = [8, 8], strides = [1, 1]} : vector<8x32xf32> to vector<8x8xf32>
    %75 = arith.truncf %74 : vector<8x8xf32> to vector<8x8xbf16>
    %76 = vector.extract_strided_slice %9 {offsets = [0, 24], sizes = [8, 8], strides = [1, 1]} : vector<8x32xf32> to vector<8x8xf32>
    %77 = arith.truncf %76 : vector<8x8xf32> to vector<8x8xbf16>
    %78 = vector.extract_strided_slice %10 {offsets = [0, 24], sizes = [8, 8], strides = [1, 1]} : vector<8x32xf32> to vector<8x8xf32>
    %79 = arith.truncf %78 : vector<8x8xf32> to vector<8x8xbf16>
    %cst_21 = arith.constant dense<0.000000e+00> : vector<8x8xf32>
    %80 = tpu.matmul %75, %77, %cst_21 {dimension_numbers = #tpu.dot_dimension_numbers<[1], [1], [0], [0], [0, 0, 1, 0], [], []>} : vector<8x8xbf16>, vector<8x8xbf16>, vector<8x8xf32> -> vector<8x8xf32>
    %cst_22 = arith.constant 0.353553385 : f32
    %81 = vector.broadcast %cst_22 : f32 to vector<8x8xf32>
    %82 = arith.mulf %80, %81 : vector<8x8xf32>
    %cst_23 = arith.constant dense<0xFF800000> : vector<8xf32>
    %83 = vector.multi_reduction <maximumf>, %82, %cst_23 [1] : vector<8x8xf32> to vector<8xf32>
    %84 = vector.shape_cast %83 : vector<8xf32> to vector<8x1xf32>
    %85 = vector.broadcast %84 : vector<8x1xf32> to vector<8x8xf32>
    %86 = arith.subf %82, %85 : vector<8x8xf32>
    %87 = math.exp %86 : vector<8x8xf32>
    %cst_24 = arith.constant dense<0.000000e+00> : vector<8xf32>
    %88 = vector.multi_reduction <add>, %87, %cst_24 [1] : vector<8x8xf32> to vector<8xf32>
    %89 = vector.shape_cast %88 : vector<8xf32> to vector<8x1xf32>
    %90 = tpu.reciprocal %89 {approx = true} : vector<8x1xf32> -> vector<8x1xf32>
    %91 = vector.broadcast %90 : vector<8x1xf32> to vector<8x8xf32>
    %92 = arith.mulf %87, %91 : vector<8x8xf32>
    %93 = arith.truncf %92 : vector<8x8xf32> to vector<8x8xbf16>
    %cst_25 = arith.constant dense<0.000000e+00> : vector<8x8xf32>
    %94 = tpu.matmul %93, %79, %cst_25 {dimension_numbers = #tpu.dot_dimension_numbers<[1], [0], [0], [1], [0, 0, 1, 1], [], []>} : vector<8x8xbf16>, vector<8x8xbf16>, vector<8x8xf32> -> vector<8x8xf32>
    %95 = tpu.concatenate %31, %52, %73, %94 in 1 : vector<8x8xf32>, vector<8x8xf32>, vector<8x8xf32>, vector<8x8xf32> -> vector<8x32xf32>
    %96 = arith.truncf %95 : vector<8x32xf32> to vector<8x32xbf16>
    %c0_26 = arith.constant 0 : index
    %c0_27 = arith.constant 0 : index
    %97 = vector.load %arg4[%c0_26, %c0_27] : memref<32x32xbf16, #tpu.memory_space<vmem>>, vector<32x32xbf16>
    %cst_28 = arith.constant dense<0.000000e+00> : vector<8x32xf32>
    %98 = tpu.matmul %96, %97, %cst_28 {dimension_numbers = #tpu.dot_dimension_numbers<[1], [0], [0], [1], [0, 0, 1, 1], [], []>} : vector<8x32xbf16>, vector<32x32xbf16>, vector<8x32xf32> -> vector<8x32xf32>
    %c0_29 = arith.constant 0 : index
    %c0_30 = arith.constant 0 : index
    %99 = vector.load %arg5[%c0_29, %c0_30] : memref<1x32xf32, #tpu.memory_space<vmem>>, vector<1x32xf32>
    %100 = vector.broadcast %99 : vector<1x32xf32> to vector<8x32xf32>
    %101 = arith.addf %98, %100 : vector<8x32xf32>
    %c0_31 = arith.constant 0 : index
    %c0_32 = arith.constant 0 : index
    %c0_33 = arith.constant 0 : index
    %102 = vector.load %arg6[%c0_31, %c0_32, %c0_33] : memref<1x8x32xf32, #tpu.memory_space<vmem>>, vector<1x8x32xf32>
    %103 = vector.shape_cast %102 : vector<1x8x32xf32> to vector<8x32xf32>
    %104 = vector.shape_cast %101 : vector<8x32xf32> to vector<1x8x32xf32>
    tpu.vector_store %arg6[%c0_31, %c0_32, %c0_33], %104 {strides = array<i32>} : memref<1x8x32xf32, #tpu.memory_space<vmem>>, vector<1x8x32xf32>,
    return
  }
  func.func @transform_0(%arg0: i32) -> (i32, i32, i32) {
    %c0_i32 = arith.constant 0 : i32
    %c0_i32_0 = arith.constant 0 : i32
    %c0_i32_1 = arith.constant 0 : i32
    return %arg0, %c0_i32, %c0_i32_0 : i32, i32, i32
  }
  func.func @transform_1(%arg0: i32) -> (i32, i32) {
    %c0_i32 = arith.constant 0 : i32
    %c0_i32_0 = arith.constant 0 : i32
    %c0_i32_1 = arith.constant 0 : i32
    return %c0_i32, %c0_i32_0 : i32, i32
  }
  func.func @transform_2(%arg0: i32) -> (i32, i32) {
    %c0_i32 = arith.constant 0 : i32
    %c0_i32_0 = arith.constant 0 : i32
    %c0_i32_1 = arith.constant 0 : i32
    return %c0_i32, %c0_i32_0 : i32, i32
  }
  func.func @transform_3(%arg0: i32) -> (i32, i32) {
    %c0_i32 = arith.constant 0 : i32
    %c0_i32_0 = arith.constant 0 : i32
    %c0_i32_1 = arith.constant 0 : i32
    return %c0_i32, %c0_i32_0 : i32, i32
  }
  func.func @transform_4(%arg0: i32) -> (i32, i32) {
    %c0_i32 = arith.constant 0 : i32
    %c0_i32_0 = arith.constant 0 : i32
    %c0_i32_1 = arith.constant 0 : i32
    return %c0_i32, %c0_i32_0 : i32, i32
  }
  func.func @transform_5(%arg0: i32) -> (i32, i32, i32) {
    %c0_i32 = arith.constant 0 : i32
    %c0_i32_0 = arith.constant 0 : i32
    %c0_i32_1 = arith.constant 0 : i32
    return %arg0, %c0_i32, %c0_i32_0 : i32, i32, i32
  }
}

</mosaic_0001>

<llo_original>
// kernel: tpu_custom_call.1
$region0: #{tpu_custom_call.1}
  #allocation0 [shape = 'u32[]', space=smem, size = 0x4, offset = 0x4, fixed_abs, tag = 'smem constant byte address 0x4 - core index']
  #allocation1 [shape = 'u32[72,128]{1,0:T(1,128)}', space=vmem, size = 0x9000, scoped, tag = 'internal scratch']
  %s0 = inlined_call_operand.hbm [shape: f32[2,8,32], index: 0, kind: input, shape index: {}]
  %s1 = inlined_call_operand.hbm [shape: bf16[32,96], index: 1, kind: input, shape index: {}]
  %s2 = inlined_call_operand.vmem [shape: f32[1,96], index: 2, kind: input, shape index: {}]
  %s3 = inlined_call_operand.hbm [shape: bf16[32,32], index: 3, kind: input, shape index: {}]
  %s4 = inlined_call_operand.vmem [shape: f32[1,32], index: 4, kind: input, shape index: {}]
  %s5 = inlined_call_operand.hbm [shape: f32[2,8,32], index: 5, kind: output, shape index: {}]
  %s6 = sld [smem:[#allocation0]]
  $region65: #{tpu_custom_call.1} parent=0
    _
  %s8 = ssub.s32 1, %s6
  %s9 = scalar_select 0, %s8, %s6
  $region1: #{tpu_custom_call.1} parent=0
    #allocation2 [shape = 'u8[8192]{0}', space=vmem, size = 0x2000, scoped, tag = 'input window, operand 0']
    #allocation3 [shape = 's32[2]{0}', space=sflag, size = 0x8, scoped, tag = 'scoped memory for tpu_custom_call.1']
    #allocation4 [shape = 's32[2]{0}', space=sflag, size = 0x8, scoped, tag = 'scoped memory for tpu_custom_call.1']
    #allocation5 [shape = 'u8[8192]{0}', space=vmem, size = 0x2000, scoped, tag = 'input window, operand 1, single buffered']
    #allocation6 [shape = 's32[1]{0}', space=sflag, size = 0x4, scoped, tag = 'scoped memory for tpu_custom_call.1']
    #allocation7 [shape = 'u8[8192]{0}', space=vmem, size = 0x2000, scoped, tag = 'input window, operand 3, single buffered']
    #allocation8 [shape = 'u8[8192]{0}', space=vmem, size = 0x2000, scoped, tag = 'output window, operand 0']
    %10 = vsyncpa [#allocation3], 0
    %s11 = scalar_lea.sflag [#allocation3], 1
    %12 = vsyncpa %s11, 0
    %13 = vsyncpa [#allocation6], 0
    %14 = vsyncpa [#allocation4], 0
    %s15 = scalar_lea.sflag [#allocation4], 1
    %16 = vsyncpa %s15, 0
    loop: start=0, step=1, limit=4
    $region2: #{tpu_custom_call.1} parent=1 // loop_pre_header
      _
    $region3: #{tpu_custom_call.1} parent=1 // loop_header
      %s18 = sphi 0, %s22
      %p19 = scmp.ge.s32.totalorder %s18, 4
      %s28 = sphi 0, %s30
      %s31 = sphi 0, %s28
      %s32 = sphi 0, %s31
      %s48 = sphi 0, %s32
      %s52 = sphi 0, %s52
      %s54 = sphi 0, %s52
      %s55 = sphi 0, %s54
      %s69 = sphi 0, %s55
      %s73 = sphi 0, %s73
      %s75 = sphi 0, %s73
      %s76 = sphi 0, %s75
      %s90 = sphi 0, %s76
      %s94 = sphi 0, %s94
      %s96 = sphi 0, %s94
      %s97 = sphi 0, %s96
      %s111 = sphi 0, %s97
      %s115 = sphi 0, %s115
      %s117 = sphi 0, %s115
      %s118 = sphi 0, %s117
      %s132 = sphi 0, %s118
      %s138 = sphi 0, %s140
      %s141 = sphi 0, %s138
      %s142 = sphi 0, %s141
      %s158 = sphi 0, %s142
    $region4: #{tpu_custom_call.1} parent=1 // loop_header_branch
      %21 = sbr.rel (%p19) target = $region8
    $region5: #{tpu_custom_call.1} parent=1 // loop_body
      %s23 = ssub.s32 %s18, 1
      %s24 = ssub.s32 %s18, 2
      %s25 = sadd.s32 %s18, 1
      %s26 = ssub.s32 %s18, %s25
      %p27 = scmp.eq.s32.totalorder %s26, 0
      %s29 = sadd.s32 %s28, 1
      %s30 = scalar_select %p27, %s28, %s29
      %p33 = pneg %p27
      %p34 = scmp.eq.s32.totalorder %s18, 1
      %p35 = por %p33, %p34
      %p36 = scmp.ne.s32.totalorder %s28, %s31
      %p37 = scmp.eq.s32.totalorder %s18, 0
      %p38 = por %p36, %p37
      %p39 = scmp.ne.s32.totalorder %s28, %s31
      %p40 = scmp.eq.s32.totalorder %s23, 1
      %p41 = por %p39, %p40
      %p42 = scmp.ne.s32.totalorder %s31, %s32
      %p43 = scmp.eq.s32.totalorder %s23, 0
      %p44 = por %p42, %p43
      %p45 = scmp.ne.s32.totalorder %s31, %s32
      %p46 = scmp.eq.s32.totalorder %s24, 1
      %p47 = por %p45, %p46
      %p49 = scmp.ne.s32.totalorder %s32, %s48
      %p50 = scmp.eq.s32.totalorder %s24, 0
      %p51 = por %p49, %p50
      %s53 = sadd.s32 %s52, 1
      %p56 = scmp.eq.s32.totalorder %s18, 1
      %p57 = scmp.ne.s32.totalorder %s52, %s54
      %p58 = scmp.eq.s32.totalorder %s18, 0
      %p59 = por %p57, %p58
      %p60 = scmp.ne.s32.totalorder %s52, %s54
      %p61 = scmp.eq.s32.totalorder %s23, 1
      %p62 = por %p60, %p61
      %p63 = scmp.ne.s32.totalorder %s54, %s55
      %p64 = scmp.eq.s32.totalorder %s23, 0
      %p65 = por %p63, %p64
      %p66 = scmp.ne.s32.totalorder %s54, %s55
      %p67 = scmp.eq.s32.totalorder %s24, 1
      %p68 = por %p66, %p67
      %p70 = scmp.ne.s32.totalorder %s55, %s69
      %p71 = scmp.eq.s32.totalorder %s24, 0
      %p72 = por %p70, %p71
      %s74 = sadd.s32 %s73, 1
      %p77 = scmp.eq.s32.totalorder %s18, 1
      %p78 = scmp.ne.s32.totalorder %s73, %s75
      %p79 = scmp.eq.s32.totalorder %s18, 0
      %p80 = por %p78, %p79
      %p81 = scmp.ne.s32.totalorder %s73, %s75
      %p82 = scmp.eq.s32.totalorder %s23, 1
      %p83 = por %p81, %p82
      %p84 = scmp.ne.s32.totalorder %s75, %s76
      %p85 = scmp.eq.s32.totalorder %s23, 0
      %p86 = por %p84, %p85
      %p87 = scmp.ne.s32.totalorder %s75, %s76
      %p88 = scmp.eq.s32.totalorder %s24, 1
      %p89 = por %p87, %p88
      %p91 = scmp.ne.s32.totalorder %s76, %s90
      %p92 = scmp.eq.s32.totalorder %s24, 0
      %p93 = por %p91, %p92
      %s95 = sadd.s32 %s94, 1
      %p98 = scmp.eq.s32.totalorder %s18, 1
      %p99 = scmp.ne.s32.totalorder %s94, %s96
      %p100 = scmp.eq.s32.totalorder %s18, 0
      %p101 = por %p99, %p100
      %p102 = scmp.ne.s32.totalorder %s94, %s96
      %p103 = scmp.eq.s32.totalorder %s23, 1
      %p104 = por %p102, %p103
      %p105 = scmp.ne.s32.totalorder %s96, %s97
      %p106 = scmp.eq.s32.totalorder %s23, 0
      %p107 = por %p105, %p106
      %p108 = scmp.ne.s32.totalorder %s96, %s97
      %p109 = scmp.eq.s32.totalorder %s24, 1
      %p110 = por %p108, %p109
      %p112 = scmp.ne.s32.totalorder %s97, %s111
      %p113 = scmp.eq.s32.totalorder %s24, 0
      %p114 = por %p112, %p113
      %s116 = sadd.s32 %s115, 1
      %p119 = scmp.eq.s32.totalorder %s18, 1
      %p120 = scmp.ne.s32.totalorder %s115, %s117
      %p121 = scmp.eq.s32.totalorder %s18, 0
      %p122 = por %p120, %p121
      %p123 = scmp.ne.s32.totalorder %s115, %s117
      %p124 = scmp.eq.s32.totalorder %s23, 1
      %p125 = por %p123, %p124
      %p126 = scmp.ne.s32.totalorder %s117, %s118
      %p127 = scmp.eq.s32.totalorder %s23, 0
      %p128 = por %p126, %p127
      %p129 = scmp.ne.s32.totalorder %s117, %s118
      %p130 = scmp.eq.s32.totalorder %s24, 1
      %p131 = por %p129, %p130
      %p133 = scmp.ne.s32.totalorder %s118, %s132
      %p134 = scmp.eq.s32.totalorder %s24, 0
      %p135 = por %p133, %p134
      %s136 = ssub.s32 %s18, %s25
      %p137 = scmp.eq.s32.totalorder %s136, 0
      %s139 = sadd.s32 %s138, 1
      %s140 = scalar_select %p137, %s138, %s139
      %p143 = pneg %p137
      %p144 = scmp.eq.s32.totalorder %s18, 1
      %p145 = por %p143, %p144
      %p146 = scmp.ne.s32.totalorder %s138, %s141
      %p147 = scmp.eq.s32.totalorder %s18, 0
      %p148 = por %p146, %p147
      %p149 = scmp.ne.s32.totalorder %s138, %s141
      %p150 = scmp.eq.s32.totalorder %s23, 1
      %p151 = por %p149, %p150
      %p152 = scmp.ne.s32.totalorder %s141, %s142
      %p153 = scmp.eq.s32.totalorder %s23, 0
      %p154 = por %p152, %p153
      %p155 = scmp.ne.s32.totalorder %s141, %s142
      %p156 = scmp.eq.s32.totalorder %s24, 1
      %p157 = por %p155, %p156
      %p159 = scmp.ne.s32.totalorder %s142, %s158
      %p160 = scmp.eq.s32.totalorder %s24, 0
      %p161 = por %p159, %p160
      %p162 = scmp.le.s32.totalorder 1, %s18
      %p163 = scmp.lt.s32.totalorder %s18, 3
      %p164 = pnand %p162, %p163
      %p165 = pneg %p164
      // Predicated region
      $region9: #{tpu_custom_call.1} parent=5 // pred_check
        _
      $region10: #{tpu_custom_call.1} parent=5 // pred_check_branch
        %167 = sbr.rel (%p164) target = $region12
      $region11: #{tpu_custom_call.1} parent=5 // pred_region
        %s168 = ssub.s32 %s18, 1
        // Predicated region
        $region13: #{tpu_custom_call.1} parent=11 // pred_check
          %p169 = pneg %p65
        $region14: #{tpu_custom_call.1} parent=11 // pred_check_branch
          %171 = sbr.rel (%p169) target = $region16
        $region15: #{tpu_custom_call.1} parent=11 // pred_region
          %173 = vsyncadd [#allocation6], 0
          %s174 = sshll.u32 %s1, 4
          %s175 = int_to_ptr.hbm [resolvable:$true] %s174
          %s176 = sshll.u32 [#allocation5], 4
          %s177 = int_to_ptr.vmem [resolvable:$true] %s176
          %182 = dma.hbm_to_vmem [thread:$0]  %s175, 256, %s177, [#allocation6], 64, 64, 4
        $region16: #{tpu_custom_call.1} parent=11 // pred_fallthru
          _
        // Predicated region
        $region17: #{tpu_custom_call.1} parent=11 // pred_check
          %p183 = pneg %p86
        $region18: #{tpu_custom_call.1} parent=11 // pred_check_branch
          %185 = sbr.rel (%p183) target = $region20
        $region19: #{tpu_custom_call.1} parent=11 // pred_region
          _
        $region20: #{tpu_custom_call.1} parent=11 // pred_fallthru
          _
        // Predicated region
        $region21: #{tpu_custom_call.1} parent=11 // pred_check
          %p186 = pneg %p107
        $region22: #{tpu_custom_call.1} parent=11 // pred_check_branch
          %188 = sbr.rel (%p186) target = $region24
        $region23: #{tpu_custom_call.1} parent=11 // pred_region
          %190 = vsyncadd [#allocation6], 0
          %s191 = sshll.u32 %s3, 4
          %s192 = int_to_ptr.hbm [resolvable:$true] %s191
          %s193 = sshll.u32 [#allocation7], 4
          %s194 = int_to_ptr.vmem [resolvable:$true] %s193
          %199 = dma.hbm_to_vmem [thread:$0]  %s192, 256, %s194, [#allocation6], 64, 64, 4
        $region24: #{tpu_custom_call.1} parent=11 // pred_fallthru
          _
        // Predicated region
        $region25: #{tpu_custom_call.1} parent=11 // pred_check
          %p200 = pneg %p128
        $region26: #{tpu_custom_call.1} parent=11 // pred_check_branch
          %202 = sbr.rel (%p200) target = $region28
        $region27: #{tpu_custom_call.1} parent=11 // pred_region
          _
        $region28: #{tpu_custom_call.1} parent=11 // pred_fallthru
          _
      $region12: #{tpu_custom_call.1} parent=5 // pred_fallthru
        _
      %p203 = scmp.lt.s32.totalorder %s18, 2
      // Predicated region
      $region29: #{tpu_custom_call.1} parent=5 // pred_check
        %p204 = pneg %p203
      $region30: #{tpu_custom_call.1} parent=5 // pred_check_branch
        %206 = sbr.rel (%p204) target = $region32
      $region31: #{tpu_custom_call.1} parent=5 // pred_region
        // Predicated region
        $region33: #{tpu_custom_call.1} parent=31 // pred_check
          %p207 = pneg %p38
        $region34: #{tpu_custom_call.1} parent=31 // pred_check_branch
          %209 = sbr.rel (%p207) target = $region36
        $region35: #{tpu_custom_call.1} parent=31 // pred_region
          %s210 = sand.u32 %s28, 1
          %s211 = scalar_lea.sflag [#allocation3], %s210
          %s212 = sand.u32 %s28, 1
          %s213 = smul.addr %s212, 8
          %s214 = scalar_lea.vmem [#allocation2], %s213
          %216 = vsyncadd %s211, 0
          %s217 = smul.addr %s18, 8
          %s218 = scalar_lea.hbm %s0, %s217
          %s220 = sshll.u32 %s218, 4
          %s221 = int_to_ptr.hbm [resolvable:$true] %s220
          %s222 = sshll.u32 %s214, 4
          %s223 = int_to_ptr.vmem [resolvable:$true] %s222
          %225 = dma.hbm_to_vmem [thread:$0]  %s221, 128, %s223, %s211
        $region36: #{tpu_custom_call.1} parent=31 // pred_fallthru
          _
      $region32: #{tpu_custom_call.1} parent=5 // pred_fallthru
        _
      %p226 = scmp.le.s32.totalorder 1, %s18
      %p227 = scmp.lt.s32.totalorder %s18, 3
      %p228 = pnand %p226, %p227
      %p229 = pneg %p228
      // Predicated region
      $region37: #{tpu_custom_call.1} parent=5 // pred_check
        _
      $region38: #{tpu_custom_call.1} parent=5 // pred_check_branch
        %231 = sbr.rel (%p228) target = $region40
      $region39: #{tpu_custom_call.1} parent=5 // pred_region
        %s232 = ssub.s32 %s18, 1
        %s233 = sand.u32 %s31, 1
        %s234 = scalar_lea.sflag [#allocation3], %s233
        %s235 = sand.u32 %s31, 1
        %s236 = smul.addr %s235, 8
        %s237 = scalar_lea.vmem [#allocation2], %s236
        // Predicated region
        $region41: #{tpu_custom_call.1} parent=39 // pred_check
          %p238 = pneg %p44
        $region42: #{tpu_custom_call.1} parent=39 // pred_check_branch
          %240 = sbr.rel (%p238) target = $region44
        $region43: #{tpu_custom_call.1} parent=39 // pred_region
          %242 = dma.done %s234, 128
        $region44: #{tpu_custom_call.1} parent=39 // pred_fallthru
          _
        // Predicated region
        $region45: #{tpu_custom_call.1} parent=39 // pred_check
          %p243 = pneg %p65
        $region46: #{tpu_custom_call.1} parent=39 // pred_check_branch
          %245 = sbr.rel (%p243) target = $region48
        $region47: #{tpu_custom_call.1} parent=39 // pred_region
          %247 = dma.done [#allocation6], 256
        $region48: #{tpu_custom_call.1} parent=39 // pred_fallthru
          _
        // Predicated region
        $region49: #{tpu_custom_call.1} parent=39 // pred_check
          %p248 = pneg %p107
        $region50: #{tpu_custom_call.1} parent=39 // pred_check_branch
          %250 = sbr.rel (%p248) target = $region52
        $region51: #{tpu_custom_call.1} parent=39 // pred_region
          %252 = dma.done [#allocation6], 256
        $region52: #{tpu_custom_call.1} parent=39 // pred_fallthru
          _
        %s253 = sand.u32 %s31, 1
        %s254 = scalar_lea.sflag [#allocation3], %s253
        %s255 = sand.u32 %s31, 1
        %s256 = smul.addr %s255, 8
        %s257 = scalar_lea.vmem [#allocation2], %s256
        %p258 = pneg %p44
        %p259 = pneg %p41
        %p260 = pneg %p65
        %p261 = pneg %p62
        %p262 = pneg %p86
        %p263 = pneg %p83
        %p264 = pneg %p107
        %p265 = pneg %p104
        %p266 = pneg %p128
        %p267 = pneg %p125
        %p268 = pneg %p154
        %p269 = pneg %p151
        %s270 = sand.u32 %s141, 1
        %s271 = scalar_lea.sflag [#allocation4], %s270
        %s272 = sand.u32 %s141, 1
        %s273 = smul.addr %s272, 8
        %s274 = scalar_lea.vmem [#allocation8], %s273
        %v276 = vld [vmem:[%s237] sm:$0xff]
        %v277 = vpack.c.bf16 %v276, %v276
        %v278 = vld [vmem:[#allocation5] sm:$0xf]
        %v279 = vld [vmem:[#allocation5 + $0x4] sm:$0xf]
        %v280 = vld [vmem:[#allocation5 + $0x8] sm:$0xf]
        %v281 = vld [vmem:[#allocation5 + $0xc] sm:$0xf]
        %v282 = vld [vmem:[%s2] sm:$0x1]
        %v284 = vperm.slane %v282, 0
        %v290 = vunpack.c.l.b16 %v278
        %v291 = vunpack.c.l.b16 %v279
        %v292 = vunpack.c.l.b16 %v280
        %v293 = vunpack.c.l.b16 %v281
        %v294 = vpack.c.b16 %v291, %v290
        %v295 = vpack.c.b16 %v293, %v292
        %vm298 = vcmask 261120
        %v300 = vsel %vm298, %v277, 0
        %302 = vmatpush.bf16.msra.mxu0 0
        %303 = vmatpush.bf16.msra.mxu0 0
        %304 = vmatpush.bf16.msra.mxu0 0
        %305 = vmatpush.bf16.msra.mxu0 0
        %306 = vmatpush.bf16.msra.mxu0 0
        %307 = vmatpush.bf16.msra.mxu0 0
        %308 = vmatpush.bf16.msra.mxu0 %v295
        %309 = vmatpush.bf16.msra.mxu0 %v294
        %310 = vmatmul.bf16.gmra.mxu0 %v300
        %v311 = vpop.f32.mrf.mxu0
        %v312 = vadd.f32 %v284, %v311
        %v313 = vpop.f32.mrf.mxu0
        %314 = vdwg.mxu0
        %v315 = vpack.c.bf16 %v312, %v312
        %317 = vrot.lane.b32.xlu0 %v315, 96
        %v318 = vpop.permute.xlu0 %317
        %vm319 = vcmask 64512
        %v321 = vsel %vm319, %v315, 0
        %v324 = vsel %vm319, %v318, 0
        %326 = vmatpush.bf16.xpose.msra.mxu0 0
        %327 = vmatpush.bf16.xpose.msra.mxu0 0
        %328 = vmatpush.bf16.xpose.msra.mxu0 0
        %329 = vmatpush.bf16.xpose.msra.mxu0 0
        %330 = vmatpush.bf16.xpose.msra.mxu0 0
        %331 = vmatpush.bf16.xpose.msra.mxu0 0
        %332 = vmatpush.bf16.xpose.msra.mxu0 0
        %333 = vmatpush.bf16.xpose.msra.mxu0 %v324
        %334 = vmatmul.bf16.gmra.mxu0 %v321
        %v335 = vpop.f32.mrf.mxu0
        %v336 = vadd.f32 0.0, %v335
        %v337 = vpop.f32.mrf.mxu0
        %338 = vdwg.mxu0
        %v339 = vmul.f32 %v336, 0.35355338
        %v340 = vsel %vm319, %v339, -inf
        %341 = vmax.xlane.f32.xlu0 %v340
        %v342 = vpop.xlane.xlu0 %341
        %v343 = vsub.f32 %v339, %v342
        %v344 = vmul.f32 %v343, 1.442695
        %v345 = vpow.pop %v344
        %v346 = vsel %vm319, %v345, 0.0
        %347 = vadd.xlane.f32.xlu0 %v346
        %v348 = vpop.xlane.xlu0 %347
        %v349 = vrcp.pop %v348
        %v350 = vmul.f32 %v345, %v349
        %v351 = vpack.c.bf16 %v350, %v350
        %352 = vrot.lane.b32.xlu0 %v315, 64
        %v353 = vpop.permute.xlu0 %352
        %v355 = vsel %vm319, %v351, 0
        %vm357 = vcmask 1043456
        %v359 = vsel %vm357, %v353, 0
        %361 = vmatpush.bf16.msra.mxu0 0
        %362 = vmatpush.bf16.msra.mxu0 0
        %363 = vmatpush.bf16.msra.mxu0 0
        %364 = vmatpush.bf16.msra.mxu0 0
        %365 = vmatpush.bf16.msra.mxu0 0
        %366 = vmatpush.bf16.msra.mxu0 0
        %367 = vmatpush.bf16.msra.mxu0 0
        %368 = vmatpush.bf16.msra.mxu0 %v359
        %369 = vmatmul.bf16.gmra.mxu0 %v355
        %v370 = vpop.f32.mrf.mxu0
        %v371 = vadd.f32 0.0, %v370
        %v372 = vpop.f32.mrf.mxu0
        %373 = vdwg.mxu0
        %374 = vrot.lane.b32.xlu0 %v315, 120
        %v375 = vpop.permute.xlu0 %374
        %376 = vrot.lane.b32.xlu0 %v315, 88
        %v377 = vpop.permute.xlu0 %376
        %v379 = vsel %vm319, %v375, 0
        %v382 = vsel %vm319, %v377, 0
        %384 = vmatpush.bf16.xpose.msra.mxu0 0
        %385 = vmatpush.bf16.xpose.msra.mxu0 0
        %386 = vmatpush.bf16.xpose.msra.mxu0 0
        %387 = vmatpush.bf16.xpose.msra.mxu0 0
        %388 = vmatpush.bf16.xpose.msra.mxu0 0
        %389 = vmatpush.bf16.xpose.msra.mxu0 0
        %390 = vmatpush.bf16.xpose.msra.mxu0 0
        %391 = vmatpush.bf16.xpose.msra.mxu0 %v382
        %392 = vmatmul.bf16.gmra.mxu0 %v379
        %v393 = vpop.f32.mrf.mxu0
        %v394 = vadd.f32 0.0, %v393
        %v395 = vpop.f32.mrf.mxu0
        %396 = vdwg.mxu0
        %v397 = vmul.f32 %v394, 0.35355338
        %v398 = vsel %vm319, %v397, -inf
        %399 = vmax.xlane.f32.xlu0 %v398
        %v400 = vpop.xlane.xlu0 %399
        %v401 = vsub.f32 %v397, %v400
        %v402 = vmul.f32 %v401, 1.442695
        %v403 = vpow.pop %v402
        %v404 = vsel %vm319, %v403, 0.0
        %405 = vadd.xlane.f32.xlu0 %v404
        %v406 = vpop.xlane.xlu0 %405
        %v407 = vrcp.pop %v406
        %v408 = vmul.f32 %v403, %v407
        %v409 = vpack.c.bf16 %v408, %v408
        %410 = vrot.lane.b32.xlu0 %v315, 56
        %v411 = vpop.permute.xlu0 %410
        %v413 = vsel %vm319, %v409, 0
        %v416 = vsel %vm357, %v411, 0
        %418 = vmatpush.bf16.msra.mxu0 0
        %419 = vmatpush.bf16.msra.mxu0 0
        %420 = vmatpush.bf16.msra.mxu0 0
        %421 = vmatpush.bf16.msra.mxu0 0
        %422 = vmatpush.bf16.msra.mxu0 0
        %423 = vmatpush.bf16.msra.mxu0 0
        %424 = vmatpush.bf16.msra.mxu0 0
        %425 = vmatpush.bf16.msra.mxu0 %v416
        %426 = vmatmul.bf16.gmra.mxu0 %v413
        %v427 = vpop.f32.mrf.mxu0
        %v428 = vadd.f32 0.0, %v427
        %v429 = vpop.f32.mrf.mxu0
        %430 = vdwg.mxu0
        %431 = vrot.lane.b32.xlu0 %v315, 112
        %v432 = vpop.permute.xlu0 %431
        %433 = vrot.lane.b32.xlu0 %v315, 80
        %v434 = vpop.permute.xlu0 %433
        %v436 = vsel %vm319, %v432, 0
        %v439 = vsel %vm319, %v434, 0
        %441 = vmatpush.bf16.xpose.msra.mxu0 0
        %442 = vmatpush.bf16.xpose.msra.mxu0 0
        %443 = vmatpush.bf16.xpose.msra.mxu0 0
        %444 = vmatpush.bf16.xpose.msra.mxu0 0
        %445 = vmatpush.bf16.xpose.msra.mxu0 0
        %446 = vmatpush.bf16.xpose.msra.mxu0 0
        %447 = vmatpush.bf16.xpose.msra.mxu0 0
        %448 = vmatpush.bf16.xpose.msra.mxu0 %v439
        %449 = vmatmul.bf16.gmra.mxu0 %v436
        %v450 = vpop.f32.mrf.mxu0
        %v451 = vadd.f32 0.0, %v450
        %v452 = vpop.f32.mrf.mxu0
        %453 = vdwg.mxu0
        %v454 = vmul.f32 %v451, 0.35355338
        %v455 = vsel %vm319, %v454, -inf
        %456 = vmax.xlane.f32.xlu0 %v455
        %v457 = vpop.xlane.xlu0 %456
        %v458 = vsub.f32 %v454, %v457
        %v459 = vmul.f32 %v458, 1.442695
        %v460 = vpow.pop %v459
        %v461 = vsel %vm319, %v460, 0.0
        %462 = vadd.xlane.f32.xlu0 %v461
        %v463 = vpop.xlane.xlu0 %462
        %v464 = vrcp.pop %v463
        %v465 = vmul.f32 %v460, %v464
        %v466 = vpack.c.bf16 %v465, %v465
        %467 = vrot.lane.b32.xlu0 %v315, 48
        %v468 = vpop.permute.xlu0 %467
        %v470 = vsel %vm319, %v466, 0
        %v473 = vsel %vm357, %v468, 0
        %475 = vmatpush.bf16.msra.mxu0 0
        %476 = vmatpush.bf16.msra.mxu0 0
        %477 = vmatpush.bf16.msra.mxu0 0
        %478 = vmatpush.bf16.msra.mxu0 0
        %479 = vmatpush.bf16.msra.mxu0 0
        %480 = vmatpush.bf16.msra.mxu0 0
        %481 = vmatpush.bf16.msra.mxu0 0
        %482 = vmatpush.bf16.msra.mxu0 %v473
        %483 = vmatmul.bf16.gmra.mxu0 %v470
        %v484 = vpop.f32.mrf.mxu0
        %v485 = vadd.f32 0.0, %v484
        %v486 = vpop.f32.mrf.mxu0
        %487 = vdwg.mxu0
        %488 = vrot.lane.b32.xlu0 %v315, 104
        %v489 = vpop.permute.xlu0 %488
        %490 = vrot.lane.b32.xlu0 %v315, 72
        %v491 = vpop.permute.xlu0 %490
        %v493 = vsel %vm319, %v489, 0
        %v496 = vsel %vm319, %v491, 0
        %498 = vmatpush.bf16.xpose.msra.mxu0 0
        %499 = vmatpush.bf16.xpose.msra.mxu0 0
        %500 = vmatpush.bf16.xpose.msra.mxu0 0
        %501 = vmatpush.bf16.xpose.msra.mxu0 0
        %502 = vmatpush.bf16.xpose.msra.mxu0 0
        %503 = vmatpush.bf16.xpose.msra.mxu0 0
        %504 = vmatpush.bf16.xpose.msra.mxu0 0
        %505 = vmatpush.bf16.xpose.msra.mxu0 %v496
        %506 = vmatmul.bf16.gmra.mxu0 %v493
        %v507 = vpop.f32.mrf.mxu0
        %v508 = vadd.f32 0.0, %v507
        %v509 = vpop.f32.mrf.mxu0
        %510 = vdwg.mxu0
        %v511 = vmul.f32 %v508, 0.35355338
        %v512 = vsel %vm319, %v511, -inf
        %513 = vmax.xlane.f32.xlu0 %v512
        %v514 = vpop.xlane.xlu0 %513
        %v515 = vsub.f32 %v511, %v514
        %v516 = vmul.f32 %v515, 1.442695
        %v517 = vpow.pop %v516
        %v518 = vsel %vm319, %v517, 0.0
        %519 = vadd.xlane.f32.xlu0 %v518
        %v520 = vpop.xlane.xlu0 %519
        %v521 = vrcp.pop %v520
        %v522 = vmul.f32 %v517, %v521
        %v523 = vpack.c.bf16 %v522, %v522
        %524 = vrot.lane.b32.xlu0 %v315, 40
        %v525 = vpop.permute.xlu0 %524
        %v527 = vsel %vm319, %v523, 0
        %v530 = vsel %vm357, %v525, 0
        %532 = vmatpush.bf16.msra.mxu0 0
        %533 = vmatpush.bf16.msra.mxu0 0
        %534 = vmatpush.bf16.msra.mxu0 0
        %535 = vmatpush.bf16.msra.mxu0 0
        %536 = vmatpush.bf16.msra.mxu0 0
        %537 = vmatpush.bf16.msra.mxu0 0
        %538 = vmatpush.bf16.msra.mxu0 0
        %539 = vmatpush.bf16.msra.mxu0 %v530
        %540 = vmatmul.bf16.gmra.mxu0 %v527
        %v541 = vpop.f32.mrf.mxu0
        %v542 = vadd.f32 0.0, %v541
        %v543 = vpop.f32.mrf.mxu0
        %544 = vdwg.mxu0
        %546 = vrot.lane.b32.xlu0 %v428, 8
        %v547 = vpop.permute.xlu0 %546
        %550 = vrot.lane.b32.xlu0 %v485, 16
        %v551 = vpop.permute.xlu0 %550
        %554 = vrot.lane.b32.xlu0 %v542, 24
        %v555 = vpop.permute.xlu0 %554
        %v557 = vsel %vm319, %v371, %v547
        %vm558 = vcmask 130048
        %v559 = vsel %vm558, %v557, %v551
        %vm560 = vcmask 195584
        %v561 = vsel %vm560, %v559, %v555
        %v562 = vpack.c.bf16 %v561, %v561
        %v563 = vld [vmem:[#allocation7] sm:$0xf]
        %v564 = vld [vmem:[#allocation7 + $0x4] sm:$0xf]
        %v565 = vld [vmem:[#allocation7 + $0x8] sm:$0xf]
        %v566 = vld [vmem:[#allocation7 + $0xc] sm:$0xf]
        %v567 = vld [vmem:[%s4] sm:$0x1]
        %v569 = vperm.slane %v567, 0
        %v575 = vunpack.c.l.b16 %v563
        %v576 = vunpack.c.l.b16 %v564
        %v577 = vunpack.c.l.b16 %v565
        %v578 = vunpack.c.l.b16 %v566
        %v579 = vpack.c.b16 %v576, %v575
        %v580 = vpack.c.b16 %v578, %v577
        %v584 = vsel %vm298, %v562, 0
        %586 = vmatpush.bf16.msra.mxu0 0
        %587 = vmatpush.bf16.msra.mxu0 0
        %588 = vmatpush.bf16.msra.mxu0 0
        %589 = vmatpush.bf16.msra.mxu0 0
        %590 = vmatpush.bf16.msra.mxu0 0
        %591 = vmatpush.bf16.msra.mxu0 0
        %592 = vmatpush.bf16.msra.mxu0 %v580
        %593 = vmatpush.bf16.msra.mxu0 %v579
        %594 = vmatmul.bf16.gmra.mxu0 %v584
        %v595 = vpop.f32.mrf.mxu0
        %v596 = vadd.f32 %v569, %v595
        %v597 = vpop.f32.mrf.mxu0
        %598 = vdwg.mxu0
        %599 = vst.msk [vmem:[%s274] sm:$0xff] %vm298, %v596
        %s600 = sand.u32 %s141, 1
        %s601 = scalar_lea.sflag [#allocation4], %s600
        %s602 = sand.u32 %s141, 1
        %s603 = smul.addr %s602, 8
        %s604 = scalar_lea.vmem [#allocation8], %s603
        // Predicated region
        $region53: #{tpu_custom_call.1} parent=39 // pred_check
          %p605 = pneg %p151
        $region54: #{tpu_custom_call.1} parent=39 // pred_check_branch
          %607 = sbr.rel (%p605) target = $region56
        $region55: #{tpu_custom_call.1} parent=39 // pred_region
          %609 = vsyncadd %s601, 0
          %s610 = smul.addr %s23, 8
          %s611 = scalar_lea.hbm %s5, %s610
          %s613 = sshll.u32 %s604, 4
          %s614 = int_to_ptr.vmem [resolvable:$true] %s613
          %s615 = sshll.u32 %s611, 4
          %s616 = int_to_ptr.hbm [resolvable:$true] %s615
          %618 = dma.vmem_to_hbm [thread:$0]  %s614, 128, %s616, %s601
        $region56: #{tpu_custom_call.1} parent=39 // pred_fallthru
          _
      $region40: #{tpu_custom_call.1} parent=5 // pred_fallthru
        _
      %p619 = scmp.le.s32.totalorder 2, %s18
      // Predicated region
      $region57: #{tpu_custom_call.1} parent=5 // pred_check
        %p620 = pneg %p619
      $region58: #{tpu_custom_call.1} parent=5 // pred_check_branch
        %622 = sbr.rel (%p620) target = $region60
      $region59: #{tpu_custom_call.1} parent=5 // pred_region
        %s623 = ssub.s32 %s18, 2
        // Predicated region
        $region61: #{tpu_custom_call.1} parent=59 // pred_check
          %p624 = pneg %p157
        $region62: #{tpu_custom_call.1} parent=59 // pred_check_branch
          %626 = sbr.rel (%p624) target = $region64
        $region63: #{tpu_custom_call.1} parent=59 // pred_region
          %s627 = sand.u32 %s142, 1
          %s628 = scalar_lea.sflag [#allocation4], %s627
          %s629 = sand.u32 %s142, 1
          %s630 = smul.addr %s629, 8
          %s631 = scalar_lea.vmem [#allocation8], %s630
          %633 = dma.done %s628, 128
        $region64: #{tpu_custom_call.1} parent=59 // pred_fallthru
          _
      $region60: #{tpu_custom_call.1} parent=5 // pred_fallthru
        _
    $region6: #{tpu_custom_call.1} parent=1 // loop_footer
      %s22 = sadd.s32 1, %s18
    $region7: #{tpu_custom_call.1} parent=1 // loop_footer_branch
      %17 = sbr.rel target = $region3
    $region8: #{tpu_custom_call.1} parent=1 // loop_exit
      _
    %634 = vsyncpa [#allocation3], 1
    %s635 = scalar_lea.sflag [#allocation3], 1
    %636 = vsyncpa %s635, 1
    %637 = vsyncpa [#allocation6], 1
    %638 = vsyncpa [#allocation4], 1
    %s639 = scalar_lea.sflag [#allocation4], 1
    %640 = vsyncpa %s639, 1

</llo_original>
